<compile_context>
chip_gen: v7x
topology: tpu7x:2x2x1
jax: 0.10.0
libtpu: 0.0.40
codegen_flags: <defaults>
</compile_context>

<pallas_src>
import jax
import jax.numpy as jnp
from jax.experimental import pallas as pl
from jax.experimental.pallas import tpu as pltpu


def _round_up(n: int, m: int) -> int:
    return ((n + m - 1) // m) * m


def _choose_tile_b(batch: int, *, max_tile: int = 2048, min_steps: int = 4) -> int:
    """Largest multiple-of-128 batch tile that still yields >= min_steps grid
    steps (>= 2 per TensorCore on v7x) when the batch allows it."""
    t = 128
    while t * 2 <= max_tile and pl.cdiv(batch, t * 2) >= min_steps:
        t *= 2
    return t


def _make_kernel(matmul_dtype):
    def kernel(x_ref, w1_ref, b1_ref, w2_ref, b2_ref, o_ref):
        # First linear: MXU matmul (bf16 operands by default, f32 accumulate),
        # bias + ReLU on the VPU.  K = input_dim may be tiny — irrelevant, the
        # MXU has enormous slack here; HBM DMA is the binding resource.
        x = x_ref[...].astype(matmul_dtype)          # in-kernel cast (free VPU)
        h = jnp.dot(x, w1_ref[...], preferred_element_type=jnp.float32)
        h = jnp.maximum(h + b1_ref[...], 0.0)        # (tile_b, H_pad) f32

        # Second linear has N=1: transpose h (XLU, slack slot) and reduce over
        # sublanes so the per-row scalar lands directly in the lane-dense
        # (1, tile_b) layout the narrow output wants.  w2_ref is the padded
        # (H_pad, 1) column; padded rows are zero so they contribute nothing.
        ht = jnp.transpose(h)                        # (H_pad, tile_b)
        y = jnp.sum(ht * w2_ref[...], axis=0, keepdims=True) + b2_ref[...]

        # sigmoid(y) = 1 / (1 + exp(-y)); exp on EUP, exact divide guarantees
        # the result is <= 1.0 (no approx-reciprocal overshoot).
        o_ref[...] = (1.0 / (1.0 + jnp.exp(-y))).astype(o_ref.dtype)

    return kernel


def discriminator_forward(x, w1, b1, w2, b2, *, tile_b=None,
                          matmul_dtype=jnp.bfloat16):
    """Forward pass of Discriminator.

    x : (B, input_dim) f32
    w1: (input_dim, hidden_dim)   (transpose of torch nn.Linear weight)
    b1: (1, hidden_dim) or (hidden_dim,)
    w2: (hidden_dim, 1)
    b2: (1, 1)
    Returns (B, 1) f32.

    matmul_dtype controls the first-matmul operand precision (bf16 by default;
    pass jnp.float32 for exact PyTorch-f32 semantics).
    """
    B, D = x.shape
    Din, H = w1.shape
    assert D == Din and w2.shape == (H, 1)

    H_pad = _round_up(H, 128)
    if tile_b is None:
        tile_b = _choose_tile_b(B)
    tile_b = _round_up(tile_b, 128)
    B_pad = _round_up(B, tile_b)
    num_tiles = B_pad // tile_b

    # Batch-pad x only when strictly needed; no feature pad / dtype cast — the
    # dominant x stream is read exactly once, straight from HBM.
    x_in = x if B_pad == B else jnp.zeros((B_pad, D), x.dtype).at[:B].set(x)

    # Small resident operands: pad hidden dim to 128 lanes, cast W1 for MXU.
    # Zero padding is exact (padded W1 cols -> h cols = relu(0+0) = 0, padded
    # w2 rows = 0, so they contribute nothing).
    w1_p = jnp.zeros((D, H_pad), matmul_dtype).at[:, :H].set(
        w1.astype(matmul_dtype))
    b1_p = jnp.zeros((1, H_pad), jnp.float32).at[:, :H].set(
        jnp.reshape(b1, (1, H)).astype(jnp.float32))
    w2_p = jnp.zeros((H_pad, 1), jnp.float32).at[:H, :].set(
        w2.astype(jnp.float32))
    b2_p = jnp.asarray(b2, jnp.float32).reshape(1, 1)

    x_itemsize = jnp.dtype(x.dtype).itemsize
    w_itemsize = jnp.dtype(matmul_dtype).itemsize
    cost = pl.CostEstimate(
        flops=int(2 * B_pad * D * H_pad + 2 * B_pad * H_pad),
        transcendentals=int(B_pad),
        bytes_accessed=int(B_pad * D * x_itemsize          # x stream
                           + B_pad * 4                      # narrow output
                           + D * H_pad * w_itemsize         # W1 (once)
                           + (2 * H_pad + 1) * 4),          # b1, w2, b2
    )

    out = pl.pallas_call(
        _make_kernel(matmul_dtype),
        out_shape=jax.ShapeDtypeStruct((num_tiles, 1, tile_b), jnp.float32),
        grid=(num_tiles,),
        in_specs=[
            pl.BlockSpec((tile_b, D), lambda i: (i, 0)),     # x: batch-tiled
            pl.BlockSpec((D, H_pad), lambda i: (0, 0)),      # W1: resident
            pl.BlockSpec((1, H_pad), lambda i: (0, 0)),      # b1: resident
            pl.BlockSpec((H_pad, 1), lambda i: (0, 0)),      # W2 col: resident
            pl.BlockSpec((1, 1), lambda i: (0, 0)),          # b2: resident
        ],
        out_specs=pl.BlockSpec((None, 1, tile_b), lambda i: (i, 0, 0)),
        compiler_params=pltpu.CompilerParams(
            dimension_semantics=("parallel",)),              # megacore on v7x
        cost_estimate=cost,
    )(x_in, w1_p, b1_p, w2_p, b2_p)

    # (num_tiles, 1, tile_b) -> (B, 1); rows are contiguous per tile.
    return out.reshape(B_pad, 1)[:B]


def init_params(key, input_dim, hidden_dim):
    """Deterministic init mimicking nn.Linear's uniform(-1/sqrt(fan_in), ...)."""
    k1, k2, k3, k4 = jax.random.split(key, 4)
    lim1 = 1.0 / jnp.sqrt(jnp.float32(input_dim))
    lim2 = 1.0 / jnp.sqrt(jnp.float32(hidden_dim))
    w1 = jax.random.uniform(k1, (input_dim, hidden_dim), jnp.float32, -lim1, lim1)
    b1 = jax.random.uniform(k2, (1, hidden_dim), jnp.float32, -lim1, lim1)
    w2 = jax.random.uniform(k3, (hidden_dim, 1), jnp.float32, -lim2, lim2)
    b2 = jax.random.uniform(k4, (1, 1), jnp.float32, -lim2, lim2)
    return w1, b1, w2, b2


def _reference(x, w1, b1, w2, b2, matmul_dtype=jnp.float32):
    """Pure-JAX reference; matmul_dtype lets us match the kernel's bf16 cast."""
    h = jnp.dot(x.astype(matmul_dtype), w1.astype(matmul_dtype),
                preferred_element_type=jnp.float32)
    h = jnp.maximum(h + jnp.reshape(b1, (1, -1)), 0.0)
    y = h @ w2 + b2
    return jax.nn.sigmoid(y)


if __name__ == "__main__":
    # Small shapes consistent with the module (input_dim=hidden_dim scaled
    # down); batch large enough that tile selection yields a 4-step grid.
    B, INPUT_DIM, HIDDEN_DIM = 1024, 32, 32

    key = jax.random.PRNGKey(0)
    kx, kp = jax.random.split(key)
    x = jax.random.normal(kx, (B, INPUT_DIM), jnp.float32)
    w1, b1, w2, b2 = init_params(kp, INPUT_DIM, HIDDEN_DIM)

    out = discriminator_forward(x, w1, b1, w2, b2)
    out = jax.block_until_ready(out)
    assert out.shape == (B, 1)

    # Tight check vs a reference using the same bf16 matmul operands
    # (residual delta = reduction-order only).
    ref_matched = _reference(x, w1, b1, w2, b2, matmul_dtype=jnp.bfloat16)
    assert jnp.allclose(out, ref_matched, atol=2e-3, rtol=2e-3)

    # Looser check vs the full-f32 PyTorch-semantics reference.
    ref_f32 = _reference(x, w1, b1, w2, b2, matmul_dtype=jnp.float32)
    assert jnp.allclose(out, ref_f32, atol=8e-3, rtol=8e-3)

    # Exact reciprocal guarantees the sigmoid range is respected.
    assert bool(jnp.all((out >= 0.0) & (out <= 1.0)))
    print("KERNEL_OK")
</pallas_src>

<mosaic_0001>
module attributes {stable_mosaic.version = 11 : i64} {
  func.func @kernel(%arg0: i32, %arg1: memref<256x32xf32, #tpu.memory_space<vmem>>, %arg2: memref<32x128xbf16, #tpu.memory_space<vmem>>, %arg3: memref<1x128xf32, #tpu.memory_space<vmem>>, %arg4: memref<128x1xf32, #tpu.memory_space<vmem>>, %arg5: memref<1x1xf32, #tpu.memory_space<vmem>>, %arg6: memref<1x1x256xf32, #tpu.memory_space<vmem>>) attributes {dimension_semantics = [#tpu.dimension_semantics<parallel>], iteration_bounds = array<i64: 4>, scalar_prefetch = 0 : i64, scratch_operands = 0 : i64, tpu.core_type = #tpu.core_type<tc>, window_params = [{transform_indices = @transform_0, window_bounds = array<i64: 256, 32>}, {pipeline_mode = #tpu.pipeline_mode<synchronous>, transform_indices = @transform_1, window_bounds = array<i64: 32, 128>}, {pipeline_mode = #tpu.pipeline_mode<synchronous>, transform_indices = @transform_2, window_bounds = array<i64: 1, 128>}, {pipeline_mode = #tpu.pipeline_mode<synchronous>, transform_indices = @transform_3, window_bounds = array<i64: 128, 1>}, {pipeline_mode = #tpu.pipeline_mode<synchronous>, transform_indices = @transform_4, window_bounds = array<i64: 1, 1>}, {transform_indices = @transform_5, window_bounds = array<i64: 1, 1, 256>}]} {
    %c0 = arith.constant 0 : index
    %c0_0 = arith.constant 0 : index
    %0 = vector.load %arg1[%c0, %c0_0] : memref<256x32xf32, #tpu.memory_space<vmem>>, vector<256x32xf32>
    %1 = arith.truncf %0 : vector<256x32xf32> to vector<256x32xbf16>
    %c0_1 = arith.constant 0 : index
    %c0_2 = arith.constant 0 : index
    %2 = vector.load %arg2[%c0_1, %c0_2] : memref<32x128xbf16, #tpu.memory_space<vmem>>, vector<32x128xbf16>
    %cst = arith.constant dense<0.000000e+00> : vector<256x128xf32>
    %3 = tpu.matmul %1, %2, %cst {dimension_numbers = #tpu.dot_dimension_numbers<[1], [0], [0], [1], [0, 0, 1, 1], [], []>} : vector<256x32xbf16>, vector<32x128xbf16>, vector<256x128xf32> -> vector<256x128xf32>
    %c0_3 = arith.constant 0 : index
    %c0_4 = arith.constant 0 : index
    %4 = vector.load %arg3[%c0_3, %c0_4] : memref<1x128xf32, #tpu.memory_space<vmem>>, vector<1x128xf32>
    %5 = vector.broadcast %4 : vector<1x128xf32> to vector<256x128xf32>
    %6 = arith.addf %3, %5 : vector<256x128xf32>
    %cst_5 = arith.constant 0.000000e+00 : f32
    %7 = vector.broadcast %cst_5 : f32 to vector<256x128xf32>
    %8 = arith.maximumf %6, %7 : vector<256x128xf32>
    %9 = tpu.transpose %8, [1, 0] : vector<256x128xf32> -> vector<128x256xf32>
    %c0_6 = arith.constant 0 : index
    %c0_7 = arith.constant 0 : index
    %10 = vector.load %arg4[%c0_6, %c0_7] : memref<128x1xf32, #tpu.memory_space<vmem>>, vector<128x1xf32>
    %11 = vector.broadcast %10 : vector<128x1xf32> to vector<128x256xf32>
    %12 = arith.mulf %9, %11 : vector<128x256xf32>
    %cst_8 = arith.constant dense<0.000000e+00> : vector<256xf32>
    %13 = vector.multi_reduction <add>, %12, %cst_8 [0] : vector<128x256xf32> to vector<256xf32>
    %14 = vector.shape_cast %13 : vector<256xf32> to vector<1x256xf32>
    %c0_9 = arith.constant 0 : index
    %c0_10 = arith.constant 0 : index
    %15 = vector.load %arg5[%c0_9, %c0_10] : memref<1x1xf32, #tpu.memory_space<vmem>>, vector<1x1xf32>
    %16 = vector.broadcast %15 : vector<1x1xf32> to vector<1x256xf32>
    %17 = arith.addf %14, %16 : vector<1x256xf32>
    %cst_11 = arith.constant 0.000000e+00 : f32
    %18 = vector.broadcast %cst_11 : f32 to vector<1x256xf32>
    %19 = arith.subf %18, %17 : vector<1x256xf32>
    %20 = math.exp %19 : vector<1x256xf32>
    %cst_12 = arith.constant 1.000000e+00 : f32
    %21 = vector.broadcast %cst_12 : f32 to vector<1x256xf32>
    %22 = arith.addf %21, %20 : vector<1x256xf32>
    %cst_13 = arith.constant 1.000000e+00 : f32
    %23 = vector.broadcast %cst_13 : f32 to vector<1x256xf32>
    %24 = arith.divf %23, %22 : vector<1x256xf32>
    %c0_14 = arith.constant 0 : index
    %c0_15 = arith.constant 0 : index
    %c0_16 = arith.constant 0 : index
    %25 = vector.load %arg6[%c0_14, %c0_15, %c0_16] : memref<1x1x256xf32, #tpu.memory_space<vmem>>, vector<1x1x256xf32>
    %26 = vector.shape_cast %25 : vector<1x1x256xf32> to vector<1x256xf32>
    %27 = vector.shape_cast %24 : vector<1x256xf32> to vector<1x1x256xf32>
    tpu.vector_store %arg6[%c0_14, %c0_15, %c0_16], %27 {strides = array<i32>} : memref<1x1x256xf32, #tpu.memory_space<vmem>>, vector<1x1x256xf32>,
    return
  }
  func.func @transform_0(%arg0: i32) -> (i32, i32) {
    %c0_i32 = arith.constant 0 : i32
    %c0_i32_0 = arith.constant 0 : i32
    return %arg0, %c0_i32 : i32, i32
  }
  func.func @transform_1(%arg0: i32) -> (i32, i32) {
    %c0_i32 = arith.constant 0 : i32
    %c0_i32_0 = arith.constant 0 : i32
    %c0_i32_1 = arith.constant 0 : i32
    return %c0_i32, %c0_i32_0 : i32, i32
  }
  func.func @transform_2(%arg0: i32) -> (i32, i32) {
    %c0_i32 = arith.constant 0 : i32
    %c0_i32_0 = arith.constant 0 : i32
    %c0_i32_1 = arith.constant 0 : i32
    return %c0_i32, %c0_i32_0 : i32, i32
  }
  func.func @transform_3(%arg0: i32) -> (i32, i32) {
    %c0_i32 = arith.constant 0 : i32
    %c0_i32_0 = arith.constant 0 : i32
    %c0_i32_1 = arith.constant 0 : i32
    return %c0_i32, %c0_i32_0 : i32, i32
  }
  func.func @transform_4(%arg0: i32) -> (i32, i32) {
    %c0_i32 = arith.constant 0 : i32
    %c0_i32_0 = arith.constant 0 : i32
    %c0_i32_1 = arith.constant 0 : i32
    return %c0_i32, %c0_i32_0 : i32, i32
  }
  func.func @transform_5(%arg0: i32) -> (i32, i32, i32) {
    %c0_i32 = arith.constant 0 : i32
    %c0_i32_0 = arith.constant 0 : i32
    %c0_i32_1 = arith.constant 0 : i32
    return %arg0, %c0_i32, %c0_i32_0 : i32, i32, i32
  }
}

</mosaic_0001>

<llo_original>
// kernel: tpu_custom_call.1
$region0: #{tpu_custom_call.1}
  #allocation0 [shape = 'u32[]', space=smem, size = 0x4, offset = 0x4, fixed_abs, tag = 'smem constant byte address 0x4 - core index']
  #allocation1 [shape = 'u32[144,128]{1,0:T(1,128)}', space=vmem, size = 0x12000, scoped, tag = 'internal scratch']
  #allocation2 [shape = 'f32[1,1]{1,0:T(1,128)S(1)}', space=vmem, size = 0x200, scoped, tag = 'scoped memory for tpu_custom_call.1']
  %s0 = inlined_call_operand.vmem [shape: f32[1024,32], index: 0, kind: input, shape index: {}]
  %s1 = inlined_call_operand.vmem [shape: bf16[32,128], index: 1, kind: input, shape index: {}]
  %s2 = inlined_call_operand.vmem [shape: f32[1,128], index: 2, kind: input, shape index: {}]
  %s3 = inlined_call_operand.vmem [shape: f32[128,1], index: 3, kind: input, shape index: {}]
  %s4 = inlined_call_operand.<no memory space> [shape: f32[1,1], index: 4, kind: input, shape index: {}]
  %s5 = inlined_call_operand.hbm [shape: f32[4,1,256], index: 5, kind: output, shape index: {}]
  %s6 = sld [smem:[#allocation0]]
  $region53: #{tpu_custom_call.1} parent=0
    _
  %s8 = ssub.s32 1, %s6
  %s9 = scalar_select 0, %s8, %s6
  %v10 = vstv %s4
  %11 = vst [vmem:[#allocation2] sm:$0x1] %v10
  $region1: #{tpu_custom_call.1} parent=0
    #allocation3 [shape = 'u8[2048]{0}', space=vmem, size = 0x800, scoped, tag = 'output window, operand 0']
    #allocation4 [shape = 's32[2]{0}', space=sflag, size = 0x8, scoped, tag = 'scoped memory for tpu_custom_call.1']
    %12 = vsyncpa [#allocation4], 0
    %s13 = scalar_lea.sflag [#allocation4], 1
    %14 = vsyncpa %s13, 0
    loop: start=0, step=1, limit=6
    $region2: #{tpu_custom_call.1} parent=1 // loop_pre_header
      _
    $region3: #{tpu_custom_call.1} parent=1 // loop_header
      %s16 = sphi 0, %s20
      %p17 = scmp.ge.s32.totalorder %s16, 6
      %s26 = sphi 0, %s28
      %s29 = sphi 0, %s26
      %s30 = sphi 0, %s29
      %s46 = sphi 0, %s30
      %s50 = sphi 0, %s50
      %s52 = sphi 0, %s50
      %s53 = sphi 0, %s52
      %s67 = sphi 0, %s53
      %s71 = sphi 0, %s71
      %s73 = sphi 0, %s71
      %s74 = sphi 0, %s73
      %s88 = sphi 0, %s74
      %s92 = sphi 0, %s92
      %s94 = sphi 0, %s92
      %s95 = sphi 0, %s94
      %s109 = sphi 0, %s95
      %s113 = sphi 0, %s113
      %s115 = sphi 0, %s113
      %s116 = sphi 0, %s115
      %s130 = sphi 0, %s116
      %s136 = sphi 0, %s138
      %s139 = sphi 0, %s136
      %s140 = sphi 0, %s139
      %s156 = sphi 0, %s140
    $region4: #{tpu_custom_call.1} parent=1 // loop_header_branch
      %19 = sbr.rel (%p17) target = $region8
    $region5: #{tpu_custom_call.1} parent=1 // loop_body
      %s21 = ssub.s32 %s16, 1
      %s22 = ssub.s32 %s16, 2
      %s23 = sadd.s32 %s16, 1
      %s24 = ssub.s32 %s16, %s23
      %p25 = scmp.eq.s32.totalorder %s24, 0
      %s27 = sadd.s32 %s26, 1
      %s28 = scalar_select %p25, %s26, %s27
      %p31 = pneg %p25
      %p32 = scmp.eq.s32.totalorder %s16, 3
      %p33 = por %p31, %p32
      %p34 = scmp.ne.s32.totalorder %s26, %s29
      %p35 = scmp.eq.s32.totalorder %s16, 0
      %p36 = por %p34, %p35
      %p37 = scmp.ne.s32.totalorder %s26, %s29
      %p38 = scmp.eq.s32.totalorder %s21, 3
      %p39 = por %p37, %p38
      %p40 = scmp.ne.s32.totalorder %s29, %s30
      %p41 = scmp.eq.s32.totalorder %s21, 0
      %p42 = por %p40, %p41
      %p43 = scmp.ne.s32.totalorder %s29, %s30
      %p44 = scmp.eq.s32.totalorder %s22, 3
      %p45 = por %p43, %p44
      %p47 = scmp.ne.s32.totalorder %s30, %s46
      %p48 = scmp.eq.s32.totalorder %s22, 0
      %p49 = por %p47, %p48
      %s51 = sadd.s32 %s50, 1
      %p54 = scmp.eq.s32.totalorder %s16, 3
      %p55 = scmp.ne.s32.totalorder %s50, %s52
      %p56 = scmp.eq.s32.totalorder %s16, 0
      %p57 = por %p55, %p56
      %p58 = scmp.ne.s32.totalorder %s50, %s52
      %p59 = scmp.eq.s32.totalorder %s21, 3
      %p60 = por %p58, %p59
      %p61 = scmp.ne.s32.totalorder %s52, %s53
      %p62 = scmp.eq.s32.totalorder %s21, 0
      %p63 = por %p61, %p62
      %p64 = scmp.ne.s32.totalorder %s52, %s53
      %p65 = scmp.eq.s32.totalorder %s22, 3
      %p66 = por %p64, %p65
      %p68 = scmp.ne.s32.totalorder %s53, %s67
      %p69 = scmp.eq.s32.totalorder %s22, 0
      %p70 = por %p68, %p69
      %s72 = sadd.s32 %s71, 1
      %p75 = scmp.eq.s32.totalorder %s16, 3
      %p76 = scmp.ne.s32.totalorder %s71, %s73
      %p77 = scmp.eq.s32.totalorder %s16, 0
      %p78 = por %p76, %p77
      %p79 = scmp.ne.s32.totalorder %s71, %s73
      %p80 = scmp.eq.s32.totalorder %s21, 3
      %p81 = por %p79, %p80
      %p82 = scmp.ne.s32.totalorder %s73, %s74
      %p83 = scmp.eq.s32.totalorder %s21, 0
      %p84 = por %p82, %p83
      %p85 = scmp.ne.s32.totalorder %s73, %s74
      %p86 = scmp.eq.s32.totalorder %s22, 3
      %p87 = por %p85, %p86
      %p89 = scmp.ne.s32.totalorder %s74, %s88
      %p90 = scmp.eq.s32.totalorder %s22, 0
      %p91 = por %p89, %p90
      %s93 = sadd.s32 %s92, 1
      %p96 = scmp.eq.s32.totalorder %s16, 3
      %p97 = scmp.ne.s32.totalorder %s92, %s94
      %p98 = scmp.eq.s32.totalorder %s16, 0
      %p99 = por %p97, %p98
      %p100 = scmp.ne.s32.totalorder %s92, %s94
      %p101 = scmp.eq.s32.totalorder %s21, 3
      %p102 = por %p100, %p101
      %p103 = scmp.ne.s32.totalorder %s94, %s95
      %p104 = scmp.eq.s32.totalorder %s21, 0
      %p105 = por %p103, %p104
      %p106 = scmp.ne.s32.totalorder %s94, %s95
      %p107 = scmp.eq.s32.totalorder %s22, 3
      %p108 = por %p106, %p107
      %p110 = scmp.ne.s32.totalorder %s95, %s109
      %p111 = scmp.eq.s32.totalorder %s22, 0
      %p112 = por %p110, %p111
      %s114 = sadd.s32 %s113, 1
      %p117 = scmp.eq.s32.totalorder %s16, 3
      %p118 = scmp.ne.s32.totalorder %s113, %s115
      %p119 = scmp.eq.s32.totalorder %s16, 0
      %p120 = por %p118, %p119
      %p121 = scmp.ne.s32.totalorder %s113, %s115
      %p122 = scmp.eq.s32.totalorder %s21, 3
      %p123 = por %p121, %p122
      %p124 = scmp.ne.s32.totalorder %s115, %s116
      %p125 = scmp.eq.s32.totalorder %s21, 0
      %p126 = por %p124, %p125
      %p127 = scmp.ne.s32.totalorder %s115, %s116
      %p128 = scmp.eq.s32.totalorder %s22, 3
      %p129 = por %p127, %p128
      %p131 = scmp.ne.s32.totalorder %s116, %s130
      %p132 = scmp.eq.s32.totalorder %s22, 0
      %p133 = por %p131, %p132
      %s134 = ssub.s32 %s16, %s23
      %p135 = scmp.eq.s32.totalorder %s134, 0
      %s137 = sadd.s32 %s136, 1
      %s138 = scalar_select %p135, %s136, %s137
      %p141 = pneg %p135
      %p142 = scmp.eq.s32.totalorder %s16, 3
      %p143 = por %p141, %p142
      %p144 = scmp.ne.s32.totalorder %s136, %s139
      %p145 = scmp.eq.s32.totalorder %s16, 0
      %p146 = por %p144, %p145
      %p147 = scmp.ne.s32.totalorder %s136, %s139
      %p148 = scmp.eq.s32.totalorder %s21, 3
      %p149 = por %p147, %p148
      %p150 = scmp.ne.s32.totalorder %s139, %s140
      %p151 = scmp.eq.s32.totalorder %s21, 0
      %p152 = por %p150, %p151
      %p153 = scmp.ne.s32.totalorder %s139, %s140
      %p154 = scmp.eq.s32.totalorder %s22, 3
      %p155 = por %p153, %p154
      %p157 = scmp.ne.s32.totalorder %s140, %s156
      %p158 = scmp.eq.s32.totalorder %s22, 0
      %p159 = por %p157, %p158
      %p160 = scmp.le.s32.totalorder 1, %s16
      %p161 = scmp.lt.s32.totalorder %s16, 5
      %p162 = pnand %p160, %p161
      %p163 = pneg %p162
      // Predicated region
      $region9: #{tpu_custom_call.1} parent=5 // pred_check
        _
      $region10: #{tpu_custom_call.1} parent=5 // pred_check_branch
        %165 = sbr.rel (%p162) target = $region12
      $region11: #{tpu_custom_call.1} parent=5 // pred_region
        %s166 = ssub.s32 %s16, 1
        // Predicated region
        $region13: #{tpu_custom_call.1} parent=11 // pred_check
          %p167 = pneg %p63
        $region14: #{tpu_custom_call.1} parent=11 // pred_check_branch
          %169 = sbr.rel (%p167) target = $region16
        $region15: #{tpu_custom_call.1} parent=11 // pred_region
          _
        $region16: #{tpu_custom_call.1} parent=11 // pred_fallthru
          _
        // Predicated region
        $region17: #{tpu_custom_call.1} parent=11 // pred_check
          %p170 = pneg %p84
        $region18: #{tpu_custom_call.1} parent=11 // pred_check_branch
          %172 = sbr.rel (%p170) target = $region20
        $region19: #{tpu_custom_call.1} parent=11 // pred_region
          _
        $region20: #{tpu_custom_call.1} parent=11 // pred_fallthru
          _
        // Predicated region
        $region21: #{tpu_custom_call.1} parent=11 // pred_check
          %p173 = pneg %p105
        $region22: #{tpu_custom_call.1} parent=11 // pred_check_branch
          %175 = sbr.rel (%p173) target = $region24
        $region23: #{tpu_custom_call.1} parent=11 // pred_region
          _
        $region24: #{tpu_custom_call.1} parent=11 // pred_fallthru
          _
        // Predicated region
        $region25: #{tpu_custom_call.1} parent=11 // pred_check
          %p176 = pneg %p126
        $region26: #{tpu_custom_call.1} parent=11 // pred_check_branch
          %178 = sbr.rel (%p176) target = $region28
        $region27: #{tpu_custom_call.1} parent=11 // pred_region
          _
        $region28: #{tpu_custom_call.1} parent=11 // pred_fallthru
          _
      $region12: #{tpu_custom_call.1} parent=5 // pred_fallthru
        _
      %p179 = scmp.lt.s32.totalorder %s16, 4
      // Predicated region
      $region29: #{tpu_custom_call.1} parent=5 // pred_check
        %p180 = pneg %p179
      $region30: #{tpu_custom_call.1} parent=5 // pred_check_branch
        %182 = sbr.rel (%p180) target = $region32
      $region31: #{tpu_custom_call.1} parent=5 // pred_region
        // Predicated region
        $region33: #{tpu_custom_call.1} parent=31 // pred_check
          %p183 = pneg %p36
        $region34: #{tpu_custom_call.1} parent=31 // pred_check_branch
          %185 = sbr.rel (%p183) target = $region36
        $region35: #{tpu_custom_call.1} parent=31 // pred_region
          %s186 = smul.u32 32, %s16
          %p187 = scmp.lt.s32.totalorder %s186, 127
          %s188 = scalar_select %p187, %s186, 127
          %s189 = smul.addr %s188, 8
          %s190 = scalar_lea.vmem %s0, %s189
          %s191 = smul.u32 32, %s16
        $region36: #{tpu_custom_call.1} parent=31 // pred_fallthru
          _
      $region32: #{tpu_custom_call.1} parent=5 // pred_fallthru
        _
      %p192 = scmp.le.s32.totalorder 1, %s16
      %p193 = scmp.lt.s32.totalorder %s16, 5
      %p194 = pnand %p192, %p193
      %p195 = pneg %p194
      // Predicated region
      $region37: #{tpu_custom_call.1} parent=5 // pred_check
        _
      $region38: #{tpu_custom_call.1} parent=5 // pred_check_branch
        %197 = sbr.rel (%p194) target = $region40
      $region39: #{tpu_custom_call.1} parent=5 // pred_region
        %s198 = ssub.s32 %s16, 1
        %s199 = smul.u32 32, %s21
        %p200 = scmp.lt.s32.totalorder %s199, 127
        %s201 = scalar_select %p200, %s199, 127
        %s202 = smul.addr %s201, 8
        %s203 = scalar_lea.vmem %s0, %s202
        %p204 = pneg %p42
        %p205 = pneg %p39
        %p206 = pneg %p63
        %p207 = pneg %p60
        %p208 = pneg %p84
        %p209 = pneg %p81
        %p210 = pneg %p105
        %p211 = pneg %p102
        %p212 = pneg %p126
        %p213 = pneg %p123
        %p214 = pneg %p152
        %p215 = pneg %p149
        %s216 = sand.u32 %s139, 1
        %s217 = scalar_lea.sflag [#allocation4], %s216
        %s218 = sand.u32 %s139, 1
        %s219 = smul.addr %s218, 2
        %s220 = scalar_lea.vmem [#allocation3], %s219
        %s221 = smul.u32 32, %s21
        %p222 = scmp.lt.s32.totalorder %s221, 127
        %s223 = scalar_select %p222, %s221, 127
        %s224 = smul.addr %s223, 8
        %s225 = scalar_lea.vmem %s0, %s224
        %s226 = smul.u32 32, %s21
        %v228 = vld [vmem:[%s225] sm:$0xff]
        %v229 = vld [vmem:[%s225 + $0x8] sm:$0xff]
        %v230 = vld [vmem:[%s225 + $0x10] sm:$0xff]
        %v231 = vld [vmem:[%s225 + $0x18] sm:$0xff]
        %v232 = vld [vmem:[%s225 + $0x20] sm:$0xff]
        %v233 = vld [vmem:[%s225 + $0x28] sm:$0xff]
        %v234 = vld [vmem:[%s225 + $0x30] sm:$0xff]
        %v235 = vld [vmem:[%s225 + $0x38] sm:$0xff]
        %v236 = vld [vmem:[%s225 + $0x40] sm:$0xff]
        %v237 = vld [vmem:[%s225 + $0x48] sm:$0xff]
        %v238 = vld [vmem:[%s225 + $0x50] sm:$0xff]
        %v239 = vld [vmem:[%s225 + $0x58] sm:$0xff]
        %v240 = vld [vmem:[%s225 + $0x60] sm:$0xff]
        %v241 = vld [vmem:[%s225 + $0x68] sm:$0xff]
        %v242 = vld [vmem:[%s225 + $0x70] sm:$0xff]
        %v243 = vld [vmem:[%s225 + $0x78] sm:$0xff]
        %v244 = vld [vmem:[%s225 + $0x80] sm:$0xff]
        %v245 = vld [vmem:[%s225 + $0x88] sm:$0xff]
        %v246 = vld [vmem:[%s225 + $0x90] sm:$0xff]
        %v247 = vld [vmem:[%s225 + $0x98] sm:$0xff]
        %v248 = vld [vmem:[%s225 + $0xa0] sm:$0xff]
        %v249 = vld [vmem:[%s225 + $0xa8] sm:$0xff]
        %v250 = vld [vmem:[%s225 + $0xb0] sm:$0xff]
        %v251 = vld [vmem:[%s225 + $0xb8] sm:$0xff]
        %v252 = vld [vmem:[%s225 + $0xc0] sm:$0xff]
        %v253 = vld [vmem:[%s225 + $0xc8] sm:$0xff]
        %v254 = vld [vmem:[%s225 + $0xd0] sm:$0xff]
        %v255 = vld [vmem:[%s225 + $0xd8] sm:$0xff]
        %v256 = vld [vmem:[%s225 + $0xe0] sm:$0xff]
        %v257 = vld [vmem:[%s225 + $0xe8] sm:$0xff]
        %v258 = vld [vmem:[%s225 + $0xf0] sm:$0xff]
        %v259 = vld [vmem:[%s225 + $0xf8] sm:$0xff]
        %v260 = vpack.c.bf16 %v229, %v228
        %v261 = vpack.c.bf16 %v231, %v230
        %v262 = vpack.c.bf16 %v233, %v232
        %v263 = vpack.c.bf16 %v235, %v234
        %v264 = vpack.c.bf16 %v237, %v236
        %v265 = vpack.c.bf16 %v239, %v238
        %v266 = vpack.c.bf16 %v241, %v240
        %v267 = vpack.c.bf16 %v243, %v242
        %v268 = vpack.c.bf16 %v245, %v244
        %v269 = vpack.c.bf16 %v247, %v246
        %v270 = vpack.c.bf16 %v249, %v248
        %v271 = vpack.c.bf16 %v251, %v250
        %v272 = vpack.c.bf16 %v253, %v252
        %v273 = vpack.c.bf16 %v255, %v254
        %v274 = vpack.c.bf16 %v257, %v256
        %v275 = vpack.c.bf16 %v259, %v258
        %v276 = vld [vmem:[%s1] sm:$0xf]
        %v277 = vld [vmem:[%s1 + $0x4] sm:$0xf]
        %v278 = vld [vmem:[%s1 + $0x8] sm:$0xf]
        %v279 = vld [vmem:[%s1 + $0xc] sm:$0xf]
        %v280 = vld [vmem:[%s2] sm:$0x1]
        %v282 = vlaneseq
        %v283 = vshrl.u32 %v282, 7
        %v284 = vsub.s32 0, %v283
        %v285 = vrot.slane %v280, %v284
        %v291 = vunpack.c.l.b16 %v276
        %v292 = vunpack.c.l.b16 %v277
        %v293 = vunpack.c.l.b16 %v278
        %v294 = vunpack.c.l.b16 %v279
        %v295 = vpack.c.b16 %v292, %v291
        %v296 = vpack.c.b16 %v294, %v293
        %vm299 = vcmask 261120
        %v301 = vsel %vm299, %v260, 0
        %v304 = vsel %vm299, %v261, 0
        %v307 = vsel %vm299, %v262, 0
        %v310 = vsel %vm299, %v263, 0
        %v313 = vsel %vm299, %v264, 0
        %v316 = vsel %vm299, %v265, 0
        %v319 = vsel %vm299, %v266, 0
        %v322 = vsel %vm299, %v267, 0
        %v325 = vsel %vm299, %v268, 0
        %v328 = vsel %vm299, %v269, 0
        %v331 = vsel %vm299, %v270, 0
        %v334 = vsel %vm299, %v271, 0
        %v337 = vsel %vm299, %v272, 0
        %v340 = vsel %vm299, %v273, 0
        %v343 = vsel %vm299, %v274, 0
        %v346 = vsel %vm299, %v275, 0
        %348 = vmatprep.subr.bf16.mxu0 0
        %349 = vmatpush1.bf16.msra.mxu0 %v295
        %350 = vmatprep.subr.bf16.mxu0 0
        %351 = vmatpush1.bf16.msra.mxu0 %v296
        %352 = vmatprep.subr.bf16.mxu0 0
        %353 = vmatpush1.bf16.msra.mxu0 0
        %354 = vmatprep.subr.bf16.mxu0 0
        %355 = vmatpush1.bf16.msra.mxu0 0
        %356 = vmatprep.subr.bf16.mxu0 0
        %357 = vmatpush1.bf16.msra.mxu0 0
        %358 = vmatprep.subr.bf16.mxu0 0
        %359 = vmatpush1.bf16.msra.mxu0 0
        %360 = vmatprep.subr.bf16.mxu0 0
        %361 = vmatpush1.bf16.msra.mxu0 0
        %362 = vmatprep.subr.bf16.mxu0 0
        %363 = vmatpush1.bf16.msra.mxu0 0
        %364 = vmatprep.subr.bf16.mxu0 0
        %365 = vmatpush1.bf16.msra.mxu0 0
        %366 = vmatprep.subr.bf16.mxu0 0
        %367 = vmatpush1.bf16.msra.mxu0 0
        %368 = vmatprep.subr.bf16.mxu0 0
        %369 = vmatpush1.bf16.msra.mxu0 0
        %370 = vmatprep.subr.bf16.mxu0 0
        %371 = vmatpush1.bf16.msra.mxu0 0
        %372 = vmatprep.subr.bf16.mxu0 0
        %373 = vmatpush1.bf16.msra.mxu0 0
        %374 = vmatprep.subr.bf16.mxu0 0
        %375 = vmatpush1.bf16.msra.mxu0 0
        %376 = vmatprep.subr.bf16.mxu0 0
        %377 = vmatpush1.bf16.msra.mxu0 0
        %378 = vmatprep.subr.bf16.mxu0 0
        %379 = vmatpush1.bf16.msra.mxu0 0
        %380 = vmatprep.mubr.bf16.mxu0 0
        %381 = vmatmul.mubr.bf16.gmra.mrb[0].mxu0 %v301
        %v382 = vpop.f32.mrb[0].mxu0
        %v383 = vadd.f32 %v285, %v382
        %v384 = vpop.f32.mrb[0].mxu0
        %v385 = vpop.f32.mrb[0].mxu0
        %v386 = vadd.f32 %v285, %v385
        %v387 = vpop.f32.mrb[0].mxu0
        %388 = vmatprep.mubr.bf16.mxu0 0
        %389 = vmatmul.mubr.bf16.gmra.mrb[0].mxu0 %v304
        %v390 = vpop.f32.mrb[0].mxu0
        %v391 = vadd.f32 %v285, %v390
        %v392 = vpop.f32.mrb[0].mxu0
        %v393 = vpop.f32.mrb[0].mxu0
        %v394 = vadd.f32 %v285, %v393
        %v395 = vpop.f32.mrb[0].mxu0
        %396 = vmatprep.mubr.bf16.mxu0 0
        %397 = vmatmul.mubr.bf16.gmra.mrb[0].mxu0 %v307
        %v398 = vpop.f32.mrb[0].mxu0
        %v399 = vadd.f32 %v285, %v398
        %v400 = vpop.f32.mrb[0].mxu0
        %v401 = vpop.f32.mrb[0].mxu0
        %v402 = vadd.f32 %v285, %v401
        %v403 = vpop.f32.mrb[0].mxu0
        %404 = vmatprep.mubr.bf16.mxu0 0
        %405 = vmatmul.mubr.bf16.gmra.mrb[0].mxu0 %v310
        %v406 = vpop.f32.mrb[0].mxu0
        %v407 = vadd.f32 %v285, %v406
        %v408 = vpop.f32.mrb[0].mxu0
        %v409 = vpop.f32.mrb[0].mxu0
        %v410 = vadd.f32 %v285, %v409
        %v411 = vpop.f32.mrb[0].mxu0
        %412 = vmatprep.mubr.bf16.mxu0 0
        %413 = vmatmul.mubr.bf16.gmra.mrb[0].mxu0 %v313
        %v414 = vpop.f32.mrb[0].mxu0
        %v415 = vadd.f32 %v285, %v414
        %v416 = vpop.f32.mrb[0].mxu0
        %v417 = vpop.f32.mrb[0].mxu0
        %v418 = vadd.f32 %v285, %v417
        %v419 = vpop.f32.mrb[0].mxu0
        %420 = vmatprep.mubr.bf16.mxu0 0
        %421 = vmatmul.mubr.bf16.gmra.mrb[0].mxu0 %v316
        %v422 = vpop.f32.mrb[0].mxu0
        %v423 = vadd.f32 %v285, %v422
        %v424 = vpop.f32.mrb[0].mxu0
        %v425 = vpop.f32.mrb[0].mxu0
        %v426 = vadd.f32 %v285, %v425
        %v427 = vpop.f32.mrb[0].mxu0
        %428 = vmatprep.mubr.bf16.mxu0 0
        %429 = vmatmul.mubr.bf16.gmra.mrb[0].mxu0 %v319
        %v430 = vpop.f32.mrb[0].mxu0
        %v431 = vadd.f32 %v285, %v430
        %v432 = vpop.f32.mrb[0].mxu0
        %v433 = vpop.f32.mrb[0].mxu0
        %v434 = vadd.f32 %v285, %v433
        %v435 = vpop.f32.mrb[0].mxu0
        %436 = vmatprep.mubr.bf16.mxu0 0
        %437 = vmatmul.mubr.bf16.gmra.mrb[0].mxu0 %v322
        %v438 = vpop.f32.mrb[0].mxu0
        %v439 = vadd.f32 %v285, %v438
        %v440 = vpop.f32.mrb[0].mxu0
        %v441 = vpop.f32.mrb[0].mxu0
        %v442 = vadd.f32 %v285, %v441
        %v443 = vpop.f32.mrb[0].mxu0
        %444 = vmatprep.mubr.bf16.mxu0 0
        %445 = vmatmul.mubr.bf16.gmra.mrb[0].mxu0 %v325
        %v446 = vpop.f32.mrb[0].mxu0
        %v447 = vadd.f32 %v285, %v446
        %v448 = vpop.f32.mrb[0].mxu0
        %v449 = vpop.f32.mrb[0].mxu0
        %v450 = vadd.f32 %v285, %v449
        %v451 = vpop.f32.mrb[0].mxu0
        %452 = vmatprep.mubr.bf16.mxu0 0
        %453 = vmatmul.mubr.bf16.gmra.mrb[0].mxu0 %v328
        %v454 = vpop.f32.mrb[0].mxu0
        %v455 = vadd.f32 %v285, %v454
        %v456 = vpop.f32.mrb[0].mxu0
        %v457 = vpop.f32.mrb[0].mxu0
        %v458 = vadd.f32 %v285, %v457
        %v459 = vpop.f32.mrb[0].mxu0
        %460 = vmatprep.mubr.bf16.mxu0 0
        %461 = vmatmul.mubr.bf16.gmra.mrb[0].mxu0 %v331
        %v462 = vpop.f32.mrb[0].mxu0
        %v463 = vadd.f32 %v285, %v462
        %v464 = vpop.f32.mrb[0].mxu0
        %v465 = vpop.f32.mrb[0].mxu0
        %v466 = vadd.f32 %v285, %v465
        %v467 = vpop.f32.mrb[0].mxu0
        %468 = vmatprep.mubr.bf16.mxu0 0
        %469 = vmatmul.mubr.bf16.gmra.mrb[0].mxu0 %v334
        %v470 = vpop.f32.mrb[0].mxu0
        %v471 = vadd.f32 %v285, %v470
        %v472 = vpop.f32.mrb[0].mxu0
        %v473 = vpop.f32.mrb[0].mxu0
        %v474 = vadd.f32 %v285, %v473
        %v475 = vpop.f32.mrb[0].mxu0
        %476 = vmatprep.mubr.bf16.mxu0 0
        %477 = vmatmul.mubr.bf16.gmra.mrb[0].mxu0 %v337
        %v478 = vpop.f32.mrb[0].mxu0
        %v479 = vadd.f32 %v285, %v478
        %v480 = vpop.f32.mrb[0].mxu0
        %v481 = vpop.f32.mrb[0].mxu0
        %v482 = vadd.f32 %v285, %v481
        %v483 = vpop.f32.mrb[0].mxu0
        %484 = vmatprep.mubr.bf16.mxu0 0
        %485 = vmatmul.mubr.bf16.gmra.mrb[0].mxu0 %v340
        %v486 = vpop.f32.mrb[0].mxu0
        %v487 = vadd.f32 %v285, %v486
        %v488 = vpop.f32.mrb[0].mxu0
        %v489 = vpop.f32.mrb[0].mxu0
        %v490 = vadd.f32 %v285, %v489
        %v491 = vpop.f32.mrb[0].mxu0
        %492 = vmatprep.mubr.bf16.mxu0 0
        %493 = vmatmul.mubr.bf16.gmra.mrb[0].mxu0 %v343
        %v494 = vpop.f32.mrb[0].mxu0
        %v495 = vadd.f32 %v285, %v494
        %v496 = vpop.f32.mrb[0].mxu0
        %v497 = vpop.f32.mrb[0].mxu0
        %v498 = vadd.f32 %v285, %v497
        %v499 = vpop.f32.mrb[0].mxu0
        %500 = vmatprep.mubr.bf16.mxu0 0
        %501 = vmatmul.mubr.bf16.gmra.mrb[0].mxu0 %v346
        %v502 = vpop.f32.mrb[0].mxu0
        %v503 = vadd.f32 %v285, %v502
        %v504 = vpop.f32.mrb[0].mxu0
        %v505 = vpop.f32.mrb[0].mxu0
        %v506 = vadd.f32 %v285, %v505
        %v507 = vpop.f32.mrb[0].mxu0
        %508 = vdwg.mxu0
        %v509 = vmax.f32 %v383, 0.0
        %v510 = vmax.f32 %v386, 0.0
        %v511 = vmax.f32 %v391, 0.0
        %v512 = vmax.f32 %v394, 0.0
        %v513 = vmax.f32 %v399, 0.0
        %v514 = vmax.f32 %v402, 0.0
        %v515 = vmax.f32 %v407, 0.0
        %v516 = vmax.f32 %v410, 0.0
        %v517 = vmax.f32 %v415, 0.0
        %v518 = vmax.f32 %v418, 0.0
        %v519 = vmax.f32 %v423, 0.0
        %v520 = vmax.f32 %v426, 0.0
        %v521 = vmax.f32 %v431, 0.0
        %v522 = vmax.f32 %v434, 0.0
        %v523 = vmax.f32 %v439, 0.0
        %v524 = vmax.f32 %v442, 0.0
        %v525 = vmax.f32 %v447, 0.0
        %v526 = vmax.f32 %v450, 0.0
        %v527 = vmax.f32 %v455, 0.0
        %v528 = vmax.f32 %v458, 0.0
        %v529 = vmax.f32 %v463, 0.0
        %v530 = vmax.f32 %v466, 0.0
        %v531 = vmax.f32 %v471, 0.0
        %v532 = vmax.f32 %v474, 0.0
        %v533 = vmax.f32 %v479, 0.0
        %v534 = vmax.f32 %v482, 0.0
        %v535 = vmax.f32 %v487, 0.0
        %v536 = vmax.f32 %v490, 0.0
        %v537 = vmax.f32 %v495, 0.0
        %v538 = vmax.f32 %v498, 0.0
        %v539 = vmax.f32 %v503, 0.0
        %v540 = vmax.f32 %v506, 0.0
        %541 = vxpose.xlu0.b32.start [1/16] %v509, 128
        %542 = vxpose.xlu0.b32.cont [2/16] %v510, 128
        %543 = vxpose.xlu0.b32.cont [3/16] %v511, 128
        %544 = vxpose.xlu0.b32.cont [4/16] %v512, 128
        %545 = vxpose.xlu0.b32.cont [5/16] %v513, 128
        %546 = vxpose.xlu0.b32.cont [6/16] %v514, 128
        %547 = vxpose.xlu0.b32.cont [7/16] %v515, 128
        %548 = vxpose.xlu0.b32.cont [8/16] %v516, 128
        %549 = vxpose.xlu0.b32.cont [9/16] %v517, 128
        %550 = vxpose.xlu0.b32.cont [10/16] %v518, 128
        %551 = vxpose.xlu0.b32.cont [11/16] %v519, 128
        %552 = vxpose.xlu0.b32.cont [12/16] %v520, 128
        %553 = vxpose.xlu0.b32.cont [13/16] %v521, 128
        %554 = vxpose.xlu0.b32.cont [14/16] %v522, 128
        %555 = vxpose.xlu0.b32.cont [15/16] %v523, 128
        %556 = vxpose.xlu0.b32.end [16/16] %v524, 128
        %v557 = vpop.trf.xlu0
        %v558 = vpop.trf.xlu0
        %v559 = vpop.trf.xlu0
        %v560 = vpop.trf.xlu0
        %v561 = vpop.trf.xlu0
        %v562 = vpop.trf.xlu0
        %v563 = vpop.trf.xlu0
        %v564 = vpop.trf.xlu0
        %v565 = vpop.trf.xlu0
        %v566 = vpop.trf.xlu0
        %v567 = vpop.trf.xlu0
        %v568 = vpop.trf.xlu0
        %v569 = vpop.trf.xlu0
        %v570 = vpop.trf.xlu0
        %v571 = vpop.trf.xlu0
        %v572 = vpop.trf.xlu0
        %573 = vxpose.xlu0.b32.start [1/16] %v525, 128
        %574 = vxpose.xlu0.b32.cont [2/16] %v526, 128
        %575 = vxpose.xlu0.b32.cont [3/16] %v527, 128
        %576 = vxpose.xlu0.b32.cont [4/16] %v528, 128
        %577 = vxpose.xlu0.b32.cont [5/16] %v529, 128
        %578 = vxpose.xlu0.b32.cont [6/16] %v530, 128
        %579 = vxpose.xlu0.b32.cont [7/16] %v531, 128
        %580 = vxpose.xlu0.b32.cont [8/16] %v532, 128
        %581 = vxpose.xlu0.b32.cont [9/16] %v533, 128
        %582 = vxpose.xlu0.b32.cont [10/16] %v534, 128
        %583 = vxpose.xlu0.b32.cont [11/16] %v535, 128
        %584 = vxpose.xlu0.b32.cont [12/16] %v536, 128
        %585 = vxpose.xlu0.b32.cont [13/16] %v537, 128
        %586 = vxpose.xlu0.b32.cont [14/16] %v538, 128
        %587 = vxpose.xlu0.b32.cont [15/16] %v539, 128
        %588 = vxpose.xlu0.b32.end [16/16] %v540, 128
        %v589 = vpop.trf.xlu0
        %v590 = vpop.trf.xlu0
        %v591 = vpop.trf.xlu0
        %v592 = vpop.trf.xlu0
        %v593 = vpop.trf.xlu0
        %v594 = vpop.trf.xlu0
        %v595 = vpop.trf.xlu0
        %v596 = vpop.trf.xlu0
        %v597 = vpop.trf.xlu0
        %v598 = vpop.trf.xlu0
        %v599 = vpop.trf.xlu0
        %v600 = vpop.trf.xlu0
        %v601 = vpop.trf.xlu0
        %v602 = vpop.trf.xlu0
        %v603 = vpop.trf.xlu0
        %v604 = vpop.trf.xlu0
        %v605 = vld [vmem:[%s3] sm:$0xff]
        %v606 = vld [vmem:[%s3 + $0x8] sm:$0xff]
        %v607 = vld [vmem:[%s3 + $0x10] sm:$0xff]
        %v608 = vld [vmem:[%s3 + $0x18] sm:$0xff]
        %v609 = vld [vmem:[%s3 + $0x20] sm:$0xff]
        %v610 = vld [vmem:[%s3 + $0x28] sm:$0xff]
        %v611 = vld [vmem:[%s3 + $0x30] sm:$0xff]
        %v612 = vld [vmem:[%s3 + $0x38] sm:$0xff]
        %v613 = vld [vmem:[%s3 + $0x40] sm:$0xff]
        %v614 = vld [vmem:[%s3 + $0x48] sm:$0xff]
        %v615 = vld [vmem:[%s3 + $0x50] sm:$0xff]
        %v616 = vld [vmem:[%s3 + $0x58] sm:$0xff]
        %v617 = vld [vmem:[%s3 + $0x60] sm:$0xff]
        %v618 = vld [vmem:[%s3 + $0x68] sm:$0xff]
        %v619 = vld [vmem:[%s3 + $0x70] sm:$0xff]
        %v620 = vld [vmem:[%s3 + $0x78] sm:$0xff]
        %622 = vset.pattern.permute.xlu0 0
        %623 = vperm.xlu0 %622, %v605
        %v624 = vpop.permute.xlu0 %623
        %627 = vset.pattern.permute.xlu0 0
        %628 = vperm.xlu0 %627, %v606
        %v629 = vpop.permute.xlu0 %628
        %632 = vset.pattern.permute.xlu0 0
        %633 = vperm.xlu0 %632, %v607
        %v634 = vpop.permute.xlu0 %633
        %637 = vset.pattern.permute.xlu0 0
        %638 = vperm.xlu0 %637, %v608
        %v639 = vpop.permute.xlu0 %638
        %642 = vset.pattern.permute.xlu0 0
        %643 = vperm.xlu0 %642, %v609
        %v644 = vpop.permute.xlu0 %643
        %647 = vset.pattern.permute.xlu0 0
        %648 = vperm.xlu0 %647, %v610
        %v649 = vpop.permute.xlu0 %648
        %652 = vset.pattern.permute.xlu0 0
        %653 = vperm.xlu0 %652, %v611
        %v654 = vpop.permute.xlu0 %653
        %657 = vset.pattern.permute.xlu0 0
        %658 = vperm.xlu0 %657, %v612
        %v659 = vpop.permute.xlu0 %658
        %662 = vset.pattern.permute.xlu0 0
        %663 = vperm.xlu0 %662, %v613
        %v664 = vpop.permute.xlu0 %663
        %667 = vset.pattern.permute.xlu0 0
        %668 = vperm.xlu0 %667, %v614
        %v669 = vpop.permute.xlu0 %668
        %672 = vset.pattern.permute.xlu0 0
        %673 = vperm.xlu0 %672, %v615
        %v674 = vpop.permute.xlu0 %673
        %677 = vset.pattern.permute.xlu0 0
        %678 = vperm.xlu0 %677, %v616
        %v679 = vpop.permute.xlu0 %678
        %682 = vset.pattern.permute.xlu0 0
        %683 = vperm.xlu0 %682, %v617
        %v684 = vpop.permute.xlu0 %683
        %687 = vset.pattern.permute.xlu0 0
        %688 = vperm.xlu0 %687, %v618
        %v689 = vpop.permute.xlu0 %688
        %692 = vset.pattern.permute.xlu0 0
        %693 = vperm.xlu0 %692, %v619
        %v694 = vpop.permute.xlu0 %693
        %697 = vset.pattern.permute.xlu0 0
        %698 = vperm.xlu0 %697, %v620
        %v699 = vpop.permute.xlu0 %698
        %v701 = vmul.f32 %v557, %v624
        %v702 = vmul.f32 %v589, %v624
        %v703 = vmul.f32 %v558, %v629
        %v704 = vmul.f32 %v590, %v629
        %v705 = vmul.f32 %v559, %v634
        %v706 = vmul.f32 %v591, %v634
        %v707 = vmul.f32 %v560, %v639
        %v708 = vmul.f32 %v592, %v639
        %v709 = vmul.f32 %v561, %v644
        %v710 = vmul.f32 %v593, %v644
        %v711 = vmul.f32 %v562, %v649
        %v712 = vmul.f32 %v594, %v649
        %v713 = vmul.f32 %v563, %v654
        %v714 = vmul.f32 %v595, %v654
        %v715 = vmul.f32 %v564, %v659
        %v716 = vmul.f32 %v596, %v659
        %v717 = vmul.f32 %v565, %v664
        %v718 = vmul.f32 %v597, %v664
        %v719 = vmul.f32 %v566, %v669
        %v720 = vmul.f32 %v598, %v669
        %v721 = vmul.f32 %v567, %v674
        %v722 = vmul.f32 %v599, %v674
        %v723 = vmul.f32 %v568, %v679
        %v724 = vmul.f32 %v600, %v679
        %v725 = vmul.f32 %v569, %v684
        %v726 = vmul.f32 %v601, %v684
        %v727 = vmul.f32 %v570, %v689
        %v728 = vmul.f32 %v602, %v689
        %v729 = vmul.f32 %v571, %v694
        %v730 = vmul.f32 %v603, %v694
        %v731 = vmul.f32 %v572, %v699
        %v732 = vmul.f32 %v604, %v699
        %v733 = vadd.f32 %v701, %v703
        %v734 = vadd.f32 %v733, %v705
        %v735 = vadd.f32 %v734, %v707
        %v736 = vadd.f32 %v735, %v709
        %v737 = vadd.f32 %v736, %v711
        %v738 = vadd.f32 %v737, %v713
        %v739 = vadd.f32 %v738, %v715
        %v740 = vadd.f32 %v739, %v717
        %v741 = vadd.f32 %v740, %v719
        %v742 = vadd.f32 %v741, %v721
        %v743 = vadd.f32 %v742, %v723
        %v744 = vadd.f32 %v743, %v725
        %v745 = vadd.f32 %v744, %v727
        %v746 = vadd.f32 %v745, %v729
        %v747 = vadd.f32 %v746, %v731
        %v748 = vrot.slane %v747, 4
        %v749 = vadd.f32 %v747, %v748
        %v750 = vrot.slane %v749, 2
        %v751 = vadd.f32 %v749, %v750
        %v752 = vrot.slane %v751, 1
        %v753 = vadd.f32 %v751, %v752
        %v754 = vadd.f32 %v702, %v704
        %v755 = vadd.f32 %v754, %v706
        %v756 = vadd.f32 %v755, %v708
        %v757 = vadd.f32 %v756, %v710
        %v758 = vadd.f32 %v757, %v712
        %v759 = vadd.f32 %v758, %v714
        %v760 = vadd.f32 %v759, %v716
        %v761 = vadd.f32 %v760, %v718
        %v762 = vadd.f32 %v761, %v720
        %v763 = vadd.f32 %v762, %v722
        %v764 = vadd.f32 %v763, %v724
        %v765 = vadd.f32 %v764, %v726
        %v766 = vadd.f32 %v765, %v728
        %v767 = vadd.f32 %v766, %v730
        %v768 = vadd.f32 %v767, %v732
        %v769 = vrot.slane %v768, 4
        %v770 = vadd.f32 %v768, %v769
        %v771 = vrot.slane %v770, 2
        %v772 = vadd.f32 %v770, %v771
        %v773 = vrot.slane %v772, 1
        %v774 = vadd.f32 %v772, %v773
        %v775 = vld [vmem:[#allocation2] sm:$0x1]
        %777 = vset.pattern.permute.xlu0 0
        %778 = vperm.xlu0 %777, %v775
        %v779 = vpop.permute.xlu0 %778
        %v781 = vlaneseq
        %v782 = vshrl.u32 %v781, 7
        %v783 = vsub.s32 0, %v782
        %v784 = vrot.slane %v779, %v783
        %v785 = vadd.f32 %v753, %v784
        %v786 = vadd.f32 %v774, %v784
        %v787 = vsub.f32 0.0, %v785
        %v788 = vsub.f32 0.0, %v786
        %v789 = vmul.f32 %v787, 1.442695
        %v790 = vpow.pop %v789
        %v791 = vmul.f32 %v788, 1.442695
        %v792 = vpow.pop %v791
        %v793 = vadd.f32 %v790, 1.0
        %v794 = vadd.f32 %v792, 1.0
        %v795 = vrcp.pop %v793
        %v796 = vmul.f32 1.0, %v795
        %v797 = vrcp.pop %v794
        %v798 = vmul.f32 1.0, %v797
        %v801 = vcombine.low %v796, %v798
        %v803 = vunpack.c.l.s4 1966171168
        %v804 = vunpack.c.0.s8 %v803
        %v805 = vlaneseq
        %v806 = vshrl.u32 %v805, 7
        %v807 = vsub.s32 %v804, %v806
        %v808 = vrot.slane %v801, %v807
        %v810 = vunpack.c.l.s4 1966171168
        %v811 = vunpack.c.0.s8 %v810
        %v812 = vlaneseq
        %v813 = vshrl.u32 %v812, 7
        %v814 = vsub.s32 %v811, %v813
        %v815 = vrot.slane %v808, %v814
        %v817 = vlaneseq
        %vm818 = vcmp.ge.s32.totalorder %v817, 0
        %vm819 = vcmp.lt.s32.totalorder %v817, 256
        %vm820 = vmand %vm818, %vm819
        %821 = vst.msk [vmem:[%s220] sm:$0x3] %vm820, %v815
        %s822 = sand.u32 %s139, 1
        %s823 = scalar_lea.sflag [#allocation4], %s822
        %s824 = sand.u32 %s139, 1
        %s825 = smul.addr %s824, 2
        %s826 = scalar_lea.vmem [#allocation3], %s825
        // Predicated region
        $region41: #{tpu_custom_call.1} parent=39 // pred_check
          %p827 = pneg %p149
        $region42: #{tpu_custom_call.1} parent=39 // pred_check_branch
          %829 = sbr.rel (%p827) target = $region44
        $region43: #{tpu_custom_call.1} parent=39 // pred_region
          %s831 = ssub.s32 32, 32
          %832 = vsyncadd %s823, %s831
          %s833 = smul.addr %s21, 2
          %s834 = smul.addr %s833, 16
          %s835 = scalar_lea.hbm %s5, %s834
          %s837 = sshll.u32 %s826, 4
          %s838 = int_to_ptr.vmem [resolvable:$true] %s837
          %840 = dma.vmem_to_hbm [thread:$0]  %s838, 32, %s835, %s823
        $region44: #{tpu_custom_call.1} parent=39 // pred_fallthru
          _
      $region40: #{tpu_custom_call.1} parent=5 // pred_fallthru
        _
      %p841 = scmp.le.s32.totalorder 2, %s16
      // Predicated region
      $region45: #{tpu_custom_call.1} parent=5 // pred_check
        %p842 = pneg %p841
      $region46: #{tpu_custom_call.1} parent=5 // pred_check_branch
        %844 = sbr.rel (%p842) target = $region48
      $region47: #{tpu_custom_call.1} parent=5 // pred_region
        %s845 = ssub.s32 %s16, 2
        // Predicated region
        $region49: #{tpu_custom_call.1} parent=47 // pred_check
          %p846 = pneg %p155
        $region50: #{tpu_custom_call.1} parent=47 // pred_check_branch
          %848 = sbr.rel (%p846) target = $region52
        $region51: #{tpu_custom_call.1} parent=47 // pred_region
          %s849 = sand.u32 %s140, 1
          %s850 = scalar_lea.sflag [#allocation4], %s849
          %s851 = sand.u32 %s140, 1
          %s852 = smul.addr %s851, 2
          %s853 = scalar_lea.vmem [#allocation3], %s852
          %854 = dma.done %s850, 32
        $region52: #{tpu_custom_call.1} parent=47 // pred_fallthru
          _
      $region48: #{tpu_custom_call.1} parent=5 // pred_fallthru
        _
    $region6: #{tpu_custom_call.1} parent=1 // loop_footer
      %s20 = sadd.s32 1, %s16
    $region7: #{tpu_custom_call.1} parent=1 // loop_footer_branch
      %15 = sbr.rel target = $region3
    $region8: #{tpu_custom_call.1} parent=1 // loop_exit
      _
    %855 = vsyncpa [#allocation4], 1
    %s856 = scalar_lea.sflag [#allocation4], 1
    %857 = vsyncpa %s856, 1

</llo_original>
